<compile_context>
chip_gen: v5e
topology: v5e:2x2
jax: 0.10.0
libtpu: 0.0.40
codegen_flags: <defaults>
</compile_context>

<pallas_src>
import functools
import math

import jax
import jax.numpy as jnp
from jax.experimental import pallas as pl
from jax.experimental.pallas import tpu as pltpu


# ---------------------------------------------------------------------------
# Fused Pallas kernel: all TCN residual blocks + output head on a (C, T) slab
# ---------------------------------------------------------------------------
def _fused_tcn_kernel(x_ref, *rest, dilations, has_ds, c_outs, k, seq_len,
                      compute_dtype):
    """x_ref : (C0, T) f32       activations, T = samples_per_tile * seq_len
    per block b (4 refs):
      w1_ref: (R_b, k*C_in)     tap-stacked weight-normed conv1 weights; if the
                                block has a 1x1 downsample, R_b = 2*C_out and
                                rows [C_out:] hold it in the tap-0 column block
      b1_ref: (R_b, 1) f32      conv1 bias (+ downsample bias in rows [C_out:])
      w2_ref: (C_out, k*C_out)
      b2_ref: (C_out, 1) f32
    head_w_ref: (E, C_last) f32,  head_b_ref: (E, 1) f32
    o_ref : (E, T) f32          output logits
    """
    n_blocks = len(dilations)
    blk_refs = rest[:4 * n_blocks]
    head_w_ref, head_b_ref, o_ref = rest[4 * n_blocks:]
    T = o_ref.shape[1]

    # position-within-sample for every lane; computed once, shared by all blocks
    pos = jax.lax.broadcasted_iota(jnp.int32, (1, T), 1) % seq_len

    def causal_taps(a, dilation, masks):
        """(C, T) f32 -> (k*C, T) f32; tap m holds a[:, t - m*dilation] (0 for t<s)."""
        taps = [a]
        for m in range(1, k):
            s = m * dilation
            # XLU lane rotation instead of zero-pad/slice/concat VMEM copies;
            # wrapped-around lanes are zeroed by the per-sample causal mask.
            shifted = pltpu.roll(a, shift=s, axis=1)
            taps.append(jnp.where(masks[m], shifted, jnp.zeros_like(shifted)))
        return jnp.concatenate(taps, axis=0)

    x = x_ref[...]                                           # (C0, T) f32
    for b in range(n_blocks):
        w1_ref, b1_ref, w2_ref, b2_ref = blk_refs[4 * b:4 * b + 4]
        d = dilations[b]
        c_out = c_outs[b]
        # causal masks for this dilation, hoisted & shared by conv1 and conv2
        masks = [None] + [pos >= (m * d) for m in range(1, k)]

        # conv1 (+ folded 1x1 downsample rows) -> single MXU matmul, f32 accum
        taps_x = causal_taps(x, d, masks).astype(compute_dtype)
        z = jnp.dot(w1_ref[...], taps_x,
                    preferred_element_type=jnp.float32) + b1_ref[...]
        if has_ds[b]:
            h = jnp.maximum(z[:c_out], 0.0)                  # conv1->chomp->ReLU
            res = z[c_out:]                                  # 1x1 downsample branch
        else:
            h = jnp.maximum(z, 0.0)
            res = x.astype(compute_dtype).astype(jnp.float32)

        # conv2 -> chomp -> ReLU   (dropout = identity, eval mode)
        taps_h = causal_taps(h, d, masks).astype(compute_dtype)
        out = jnp.maximum(
            jnp.dot(w2_ref[...], taps_h,
                    preferred_element_type=jnp.float32) + b2_ref[...], 0.0)

        # residual add + final ReLU; activation stays in vregs for next block
        x = jnp.maximum(out + res, 0.0)

    # fused output head (f32 operands: tiny K, matches the JAX reference)
    logits = jnp.dot(head_w_ref[...], x,
                     preferred_element_type=jnp.float32) + head_b_ref[...]
    o_ref[...] = logits.astype(o_ref.dtype)


# ---------------------------------------------------------------------------
# Wrapper helpers
# ---------------------------------------------------------------------------
def _apply_weight_norm(v, g):
    # PyTorch weight_norm with dim=0: per-output-channel L2 norm over (in, k)
    norm = jnp.sqrt(jnp.sum(v * v, axis=(1, 2), keepdims=True))
    return g * v / norm


def _stack_taps(w):
    # (C_out, C_in, k) -> (C_out, k*C_in); column block m holds w[:, :, k-1-m],
    # matching the kernel's tap ordering (tap m reads x[:, t - m*dilation]).
    c_out, c_in, k = w.shape
    return w[:, :, ::-1].transpose(0, 2, 1).reshape(c_out, k * c_in)


def _vmem_capacity_bytes():
    try:
        return int(pltpu.get_tpu_info().vmem_capacity_bytes)
    except Exception:
        return 64 * 1024 * 1024   # conservative (v7x) fallback


def _choose_samples_per_tile(n, seq_len, max_lanes):
    # whole samples per lane tile, lane extent a multiple of 128 (lane-dense
    # unmasked stores), dividing the padded batch exactly.
    cands = [g for g in range(1, n + 1)
             if n % g == 0 and (g * seq_len) % 128 == 0]
    fitting = [g for g in cands if g * seq_len <= max_lanes]
    if not fitting:
        return min(cands)
    # prefer >= 2 "parallel" grid steps (v7x megacore) while tiles stay large
    multi = [g for g in fitting if n // g >= 2 and g * seq_len >= 1024]
    return max(multi) if multi else max(fitting)


# ---------------------------------------------------------------------------
# Fused TCN stack (all residual blocks + head) as one pallas_call
# ---------------------------------------------------------------------------
def _tcn_stack_pallas(combined, params, *, kernel_size, compute_dtype,
                      samples_per_tile=None):
    """combined: (B, L, C0) f32  ->  logits (B, L, N_EMOTIONS) f32."""
    b, seq_len, c0 = combined.shape
    k = kernel_size
    head_w = params["head_w"].astype(jnp.float32)            # (E, C_last)
    n_emo = head_w.shape[0]
    head_b = params["head_b"].reshape(n_emo, 1).astype(jnp.float32)

    # lane-dense layout: pad the batch so every tile has a 128-multiple lane extent
    rep = 128 // math.gcd(seq_len, 128)
    n_pad = -(-b // rep) * rep
    x = combined
    if n_pad != b:
        x = jnp.concatenate(
            [x, jnp.zeros((n_pad - b, seq_len, c0), x.dtype)], axis=0)
    x2d = x.transpose(2, 0, 1).reshape(c0, n_pad * seq_len)  # (C0, N*L) f32
    total = n_pad * seq_len

    # stacked weights: weight-norm applied, 1x1 downsample folded into conv1
    weights, dilations, has_ds, c_outs = [], [], [], []
    c_in = c0
    for blk in params["tcn_blocks"]:
        w1 = _apply_weight_norm(blk["v1"], blk["g1"])        # (C_out, C_in, k)
        w2 = _apply_weight_norm(blk["v2"], blk["g2"])        # (C_out, C_out, k)
        c_out = w1.shape[0]
        w1s = _stack_taps(w1)                                # (C_out, k*C_in)
        b1 = blk["b1"].reshape(c_out, 1).astype(jnp.float32)
        ds = "wd" in blk
        if ds:
            wd = blk["wd"].reshape(c_out, c_in)
            wd_row = jnp.concatenate(
                [wd, jnp.zeros((c_out, (k - 1) * c_in), wd.dtype)], axis=1)
            w1s = jnp.concatenate([w1s, wd_row], axis=0)     # (2*C_out, k*C_in)
            b1 = jnp.concatenate(
                [b1, blk["bd"].reshape(c_out, 1).astype(jnp.float32)], axis=0)
        weights += [w1s.astype(compute_dtype), b1,
                    _stack_taps(w2).astype(compute_dtype),
                    blk["b2"].reshape(c_out, 1).astype(jnp.float32)]
        dilations.append(int(blk["dilation"]))
        has_ds.append(ds)
        c_outs.append(c_out)
        c_in = c_out

    # tiling / VMEM budget derived from the device's actual VMEM capacity
    isz = jnp.dtype(compute_dtype).itemsize
    c_max = max([c0] + c_outs)
    per_lane = (2 * c0 * 4 + 2 * n_emo * 4      # in/out tiles, double-buffered f32
                + 2 * k * c_max * 4             # f32 tap slabs (rolled + masked)
                + 2 * k * c_max * isz           # compute-dtype tap slabs
                + 6 * c_max * 4)                # f32 intermediates (z/h/out/res/x)
    weight_bytes = (sum(int(w.size) * w.dtype.itemsize for w in weights)
                    + head_w.size * 4 + head_b.size * 4)
    cap = _vmem_capacity_bytes()
    budget = int(0.4 * cap)
    max_lanes = min(8192, max(128, (budget // per_lane) // 128 * 128))

    if samples_per_tile is None:
        spt = _choose_samples_per_tile(n_pad, seq_len, max_lanes)
    else:
        spt = int(samples_per_tile)
        if n_pad % spt != 0:
            raise ValueError(
                f"samples_per_tile={spt} must divide padded batch {n_pad}")
        if (spt * seq_len) % 128 != 0:
            raise ValueError("samples_per_tile*seq_len must be a multiple of 128")
    tile = spt * seq_len
    grid = (n_pad // spt,)

    vmem_limit = int(min(int(0.75 * cap),
                         max(32 * 1024 * 1024,
                             2 * (per_lane * tile + 2 * weight_bytes))))

    const = lambda j: (0, 0)
    in_specs = [pl.BlockSpec((c0, tile), lambda j: (0, j))]
    in_specs += [pl.BlockSpec(tuple(w.shape), const) for w in weights]
    in_specs += [pl.BlockSpec(tuple(head_w.shape), const),
                 pl.BlockSpec(tuple(head_b.shape), const)]

    kernel = functools.partial(
        _fused_tcn_kernel, dilations=tuple(dilations), has_ds=tuple(has_ds),
        c_outs=tuple(c_outs), k=k, seq_len=seq_len, compute_dtype=compute_dtype)

    out2d = pl.pallas_call(
        kernel,
        out_shape=jax.ShapeDtypeStruct((n_emo, total), jnp.float32),
        grid_spec=pltpu.PrefetchScalarGridSpec(
            num_scalar_prefetch=0,
            grid=grid,
            in_specs=in_specs,
            out_specs=pl.BlockSpec((n_emo, tile), lambda j: (0, j))),
        compiler_params=pltpu.CompilerParams(
            dimension_semantics=("parallel",),
            vmem_limit_bytes=vmem_limit),
    )(x2d, *weights, head_w, head_b)

    # (E, n_pad*L) -> drop padded samples -> (B, L, E)
    return out2d[:, :b * seq_len].reshape(n_emo, b, seq_len).transpose(1, 2, 0)


# ---------------------------------------------------------------------------
# ConditionalTCN glue (plain JAX) shared by the Pallas and reference paths
# ---------------------------------------------------------------------------
def _build_tcn_input(batch, params):
    video_cond = batch["video_features"].mean(axis=1) @ params["video_w"].T + params["video_b"]
    event_cond = batch["event_type"] @ params["event_w"].T + params["event_b"]
    va_cond = batch["va_values"] @ params["va_w"].T + params["va_b"]
    group_cond = params["group_emb"][batch["group_label"]]
    context = jnp.concatenate([video_cond, event_cond, va_cond, group_cond], axis=1)

    true_emo = batch["true_emo_seq"]                       # (B, L, N_EMOTIONS)
    b, seq_len, n_emo = true_emo.shape
    start = jnp.zeros((b, 1, n_emo), true_emo.dtype)       # teacher forcing
    shifted = jnp.concatenate([start, true_emo[:, :-1, :]], axis=1)
    in_proj = shifted @ params["in_proj_w"].T + params["in_proj_b"]
    ctx = jnp.broadcast_to(context[:, None, :], (b, seq_len, context.shape[-1]))
    return jnp.concatenate([in_proj, ctx], axis=2)         # (B, L, C0 + MODEL_DIM)


def conditional_tcn_forward(batch, params, *, kernel_size=3,
                            compute_dtype=jnp.bfloat16, use_pallas=True):
    combined = _build_tcn_input(batch, params)             # (B, L, C) f32
    if use_pallas:
        return _tcn_stack_pallas(combined, params, kernel_size=kernel_size,
                                 compute_dtype=compute_dtype)
    x = combined.transpose(0, 2, 1)                        # (B, C, L)
    for blk in params["tcn_blocks"]:
        x = _ref_tcn_block(x, blk, kernel_size=kernel_size,
                           dilation=blk["dilation"], compute_dtype=compute_dtype)
    tcn_out = x.transpose(0, 2, 1)
    return tcn_out @ params["head_w"].T + params["head_b"]


# ---------------------------------------------------------------------------
# Pure-JAX reference block (mirrors the kernel's mixed precision)
# ---------------------------------------------------------------------------
def _ref_tcn_block(x, blk, *, kernel_size, dilation, compute_dtype):
    # x: (B, C_in, L) f32. Conv/matmul operands in compute_dtype, f32 accumulation.
    pad = (kernel_size - 1) * dilation
    cd = compute_dtype
    w1 = _apply_weight_norm(blk["v1"], blk["g1"])
    w2 = _apply_weight_norm(blk["v2"], blk["g2"])

    def causal_conv(inp, w, b):
        y = jax.lax.conv_general_dilated(
            inp.astype(cd), w.astype(cd), window_strides=(1,),
            padding=[(pad, pad)], rhs_dilation=(dilation,),
            dimension_numbers=("NCH", "OIH", "NCH"),
            preferred_element_type=jnp.float32,
            precision=jax.lax.Precision.HIGHEST)
        y = y[:, :, :inp.shape[2]]                         # Chomp1d
        return y + b[None, :, None]

    h = jax.nn.relu(causal_conv(x, w1, blk["b1"]))
    out = jax.nn.relu(causal_conv(h, w2, blk["b2"]))
    if "wd" in blk:
        res = jnp.einsum("oc,ncl->nol",
                         blk["wd"][:, :, 0].astype(cd), x.astype(cd),
                         preferred_element_type=jnp.float32,
                         precision=jax.lax.Precision.HIGHEST) \
              + blk["bd"][None, :, None]
    else:
        res = x.astype(cd).astype(jnp.float32)
    return jax.nn.relu(out + res)


# ---------------------------------------------------------------------------
if __name__ == "__main__":
    MODEL_DIM, N_EMOTIONS, N_GROUPS, VIDEO_FEAT_DIM = 32, 8, 4, 16
    SEQ_LEN, BATCH, VIDEO_T, KERNEL_SIZE = 16, 8, 4, 3
    CDP = MODEL_DIM // 4
    num_channels = [MODEL_DIM] * 3

    keys = iter(jax.random.split(jax.random.PRNGKey(0), 64))

    def linear(out_dim, in_dim):
        s = 1.0 / (in_dim ** 0.5)
        return (jax.random.uniform(next(keys), (out_dim, in_dim), jnp.float32, -s, s),
                jax.random.uniform(next(keys), (out_dim,), jnp.float32, -s, s))

    video_w, video_b = linear(CDP, VIDEO_FEAT_DIM)
    event_w, event_b = linear(CDP, 2)
    va_w, va_b = linear(CDP, 2)
    in_proj_w, in_proj_b = linear(num_channels[0], N_EMOTIONS)
    head_w, head_b = linear(N_EMOTIONS, num_channels[-1])

    blocks = []
    for i in range(len(num_channels)):
        dilation = 2 ** i
        c_in = num_channels[i - 1] if i > 0 else num_channels[0] + MODEL_DIM
        c_out = num_channels[i]
        blk = {
            "dilation": dilation,
            "v1": jax.random.normal(next(keys), (c_out, c_in, KERNEL_SIZE), jnp.float32),
            "g1": jax.random.uniform(next(keys), (c_out, 1, 1), jnp.float32, 0.5, 1.5),
            "b1": jax.random.normal(next(keys), (c_out,), jnp.float32) * 0.1,
            "v2": jax.random.normal(next(keys), (c_out, c_out, KERNEL_SIZE), jnp.float32),
            "g2": jax.random.uniform(next(keys), (c_out, 1, 1), jnp.float32, 0.5, 1.5),
            "b2": jax.random.normal(next(keys), (c_out,), jnp.float32) * 0.1,
        }
        if c_in != c_out:  # 1x1 downsample, as in the PyTorch block
            blk["wd"] = jax.random.normal(next(keys), (c_out, c_in, 1),
                                          jnp.float32) / (c_in ** 0.5)
            blk["bd"] = jax.random.normal(next(keys), (c_out,), jnp.float32) * 0.1
        blocks.append(blk)

    params = {
        "group_emb": jax.random.normal(next(keys), (N_GROUPS, CDP), jnp.float32) * 0.5,
        "video_w": video_w, "video_b": video_b,
        "event_w": event_w, "event_b": event_b,
        "va_w": va_w, "va_b": va_b,
        "in_proj_w": in_proj_w, "in_proj_b": in_proj_b,
        "head_w": head_w, "head_b": head_b,
        "tcn_blocks": blocks,
    }

    batch = {
        "video_features": jax.random.normal(next(keys), (BATCH, VIDEO_T, VIDEO_FEAT_DIM),
                                            jnp.float32),
        "event_type": jax.random.normal(next(keys), (BATCH, 2), jnp.float32),
        "va_values": jax.random.uniform(next(keys), (BATCH, 2), jnp.float32, -1.0, 1.0),
        "group_label": jax.random.randint(next(keys), (BATCH,), 0, N_GROUPS),
        "true_emo_seq": jax.nn.softmax(
            jax.random.normal(next(keys), (BATCH, SEQ_LEN, N_EMOTIONS), jnp.float32),
            axis=-1),
    }

    # primary path: bf16 matmul operands, f32 accumulation / epilogue, fused head
    y_bf16 = jax.block_until_ready(conditional_tcn_forward(
        batch, params, kernel_size=KERNEL_SIZE,
        compute_dtype=jnp.bfloat16, use_pallas=True))
    r_bf16 = jax.block_until_ready(conditional_tcn_forward(
        batch, params, kernel_size=KERNEL_SIZE,
        compute_dtype=jnp.bfloat16, use_pallas=False))
    assert y_bf16.shape == (BATCH, SEQ_LEN, N_EMOTIONS), y_bf16.shape
    assert jnp.allclose(y_bf16, r_bf16, rtol=3e-2, atol=3e-2), \
        float(jnp.max(jnp.abs(y_bf16 - r_bf16)))

    # full-f32 path for a tighter semantic check against the conv reference
    y_f32 = jax.block_until_ready(conditional_tcn_forward(
        batch, params, kernel_size=KERNEL_SIZE,
        compute_dtype=jnp.float32, use_pallas=True))
    r_f32 = jax.block_until_ready(conditional_tcn_forward(
        batch, params, kernel_size=KERNEL_SIZE,
        compute_dtype=jnp.float32, use_pallas=False))
    assert jnp.allclose(y_f32, r_f32, rtol=1e-2, atol=1e-2), \
        float(jnp.max(jnp.abs(y_f32 - r_f32)))

    print("KERNEL_OK")
</pallas_src>

<mosaic_0001>
module attributes {stable_mosaic.version = 11 : i64} {
  func.func @_fused_tcn_kernel(%arg0: i32, %arg1: memref<64x128xf32, #tpu.memory_space<vmem>>, %arg2: memref<64x192xbf16, #tpu.memory_space<vmem>>, %arg3: memref<64x1xf32, #tpu.memory_space<vmem>>, %arg4: memref<32x96xbf16, #tpu.memory_space<vmem>>, %arg5: memref<32x1xf32, #tpu.memory_space<vmem>>, %arg6: memref<32x96xbf16, #tpu.memory_space<vmem>>, %arg7: memref<32x1xf32, #tpu.memory_space<vmem>>, %arg8: memref<32x96xbf16, #tpu.memory_space<vmem>>, %arg9: memref<32x1xf32, #tpu.memory_space<vmem>>, %arg10: memref<32x96xbf16, #tpu.memory_space<vmem>>, %arg11: memref<32x1xf32, #tpu.memory_space<vmem>>, %arg12: memref<32x96xbf16, #tpu.memory_space<vmem>>, %arg13: memref<32x1xf32, #tpu.memory_space<vmem>>, %arg14: memref<8x32xf32, #tpu.memory_space<vmem>>, %arg15: memref<8x1xf32, #tpu.memory_space<vmem>>, %arg16: memref<8x128xf32, #tpu.memory_space<vmem>>) attributes {dimension_semantics = [#tpu.dimension_semantics<parallel>], iteration_bounds = array<i64: 1>, scalar_prefetch = 0 : i64, scratch_operands = 0 : i64, tpu.core_type = #tpu.core_type<tc>, window_params = [{transform_indices = @transform_0, window_bounds = array<i64: 64, 128>}, {pipeline_mode = #tpu.pipeline_mode<synchronous>, transform_indices = @transform_1, window_bounds = array<i64: 64, 192>}, {pipeline_mode = #tpu.pipeline_mode<synchronous>, transform_indices = @transform_2, window_bounds = array<i64: 64, 1>}, {pipeline_mode = #tpu.pipeline_mode<synchronous>, transform_indices = @transform_3, window_bounds = array<i64: 32, 96>}, {pipeline_mode = #tpu.pipeline_mode<synchronous>, transform_indices = @transform_4, window_bounds = array<i64: 32, 1>}, {pipeline_mode = #tpu.pipeline_mode<synchronous>, transform_indices = @transform_5, window_bounds = array<i64: 32, 96>}, {pipeline_mode = #tpu.pipeline_mode<synchronous>, transform_indices = @transform_6, window_bounds = array<i64: 32, 1>}, {pipeline_mode = #tpu.pipeline_mode<synchronous>, transform_indices = @transform_7, window_bounds = array<i64: 32, 96>}, {pipeline_mode = #tpu.pipeline_mode<synchronous>, transform_indices = @transform_8, window_bounds = array<i64: 32, 1>}, {pipeline_mode = #tpu.pipeline_mode<synchronous>, transform_indices = @transform_9, window_bounds = array<i64: 32, 96>}, {pipeline_mode = #tpu.pipeline_mode<synchronous>, transform_indices = @transform_10, window_bounds = array<i64: 32, 1>}, {pipeline_mode = #tpu.pipeline_mode<synchronous>, transform_indices = @transform_11, window_bounds = array<i64: 32, 96>}, {pipeline_mode = #tpu.pipeline_mode<synchronous>, transform_indices = @transform_12, window_bounds = array<i64: 32, 1>}, {pipeline_mode = #tpu.pipeline_mode<synchronous>, transform_indices = @transform_13, window_bounds = array<i64: 8, 32>}, {pipeline_mode = #tpu.pipeline_mode<synchronous>, transform_indices = @transform_14, window_bounds = array<i64: 8, 1>}, {transform_indices = @transform_15, window_bounds = array<i64: 8, 128>}]} {
    %0 = tpu.iota {dimensions = array<i32: 1>} : vector<1x128xi32>
    %c16_i32 = arith.constant 16 : i32
    %c0_i32 = arith.constant 0 : i32
    %1 = arith.cmpi eq, %c16_i32, %c0_i32 : i32
    %c1_i32 = arith.constant 1 : i32
    %2 = arith.select %1, %c1_i32, %c16_i32 : i32
    %3 = vector.broadcast %2 : i32 to vector<1x128xi32>
    %4 = arith.remsi %0, %3 : vector<1x128xi32>
    %c0_i32_0 = arith.constant 0 : i32
    %5 = vector.broadcast %c0_i32_0 : i32 to vector<1x128xi32>
    %6 = arith.cmpi ne, %4, %5 : vector<1x128xi32>
    %c0_i32_1 = arith.constant 0 : i32
    %7 = vector.broadcast %c0_i32_1 : i32 to vector<1x128xi32>
    %8 = arith.cmpi slt, %4, %7 : vector<1x128xi32>
    %c0_i32_2 = arith.constant 0 : i32
    %9 = arith.cmpi slt, %2, %c0_i32_2 : i32
    %10 = vector.broadcast %9 : i1 to vector<1x128xi1>
    %11 = vector.broadcast %10 : vector<1x128xi1> to vector<1x128xi1>
    %12 = arith.xori %8, %11 : vector<1x128xi1>
    %13 = arith.andi %12, %6 : vector<1x128xi1>
    %14 = vector.broadcast %2 : i32 to vector<1x128xi32>
    %15 = arith.addi %4, %14 : vector<1x128xi32>
    %16 = arith.select %13, %15, %4 : vector<1x128xi1>, vector<1x128xi32>
    %c0 = arith.constant 0 : index
    %c0_3 = arith.constant 0 : index
    %17 = vector.load %arg1[%c0, %c0_3] : memref<64x128xf32, #tpu.memory_space<vmem>>, vector<64x128xf32>
    %c1_i32_4 = arith.constant 1 : i32
    %18 = vector.broadcast %c1_i32_4 : i32 to vector<1x128xi32>
    %19 = arith.cmpi sge, %16, %18 : vector<1x128xi32>
    %c2_i32 = arith.constant 2 : i32
    %20 = vector.broadcast %c2_i32 : i32 to vector<1x128xi32>
    %21 = arith.cmpi sge, %16, %20 : vector<1x128xi32>
    %c1_i32_5 = arith.constant 1 : i32
    %22 = tpu.dynamic_rotate %17 by %c1_i32_5 dim 1 : vector<64x128xf32>, i32 -> vector<64x128xf32>
    %cst = arith.constant 0.000000e+00 : f32
    %23 = vector.broadcast %cst : f32 to vector<64x128xf32>
    %24 = vector.shape_cast %19 : vector<1x128xi1> to vector<1x128xi1>
    %25 = vector.broadcast %24 : vector<1x128xi1> to vector<64x128xi1>
    %26 = arith.select %25, %22, %23 : vector<64x128xi1>, vector<64x128xf32>
    %c2_i32_6 = arith.constant 2 : i32
    %27 = tpu.dynamic_rotate %17 by %c2_i32_6 dim 1 : vector<64x128xf32>, i32 -> vector<64x128xf32>
    %cst_7 = arith.constant 0.000000e+00 : f32
    %28 = vector.broadcast %cst_7 : f32 to vector<64x128xf32>
    %29 = vector.shape_cast %21 : vector<1x128xi1> to vector<1x128xi1>
    %30 = vector.broadcast %29 : vector<1x128xi1> to vector<64x128xi1>
    %31 = arith.select %30, %27, %28 : vector<64x128xi1>, vector<64x128xf32>
    %32 = tpu.concatenate %17, %26, %31 in 0 : vector<64x128xf32>, vector<64x128xf32>, vector<64x128xf32> -> vector<192x128xf32>
    %33 = arith.truncf %32 : vector<192x128xf32> to vector<192x128xbf16>
    %c0_8 = arith.constant 0 : index
    %c0_9 = arith.constant 0 : index
    %34 = vector.load %arg2[%c0_8, %c0_9] : memref<64x192xbf16, #tpu.memory_space<vmem>>, vector<64x192xbf16>
    %cst_10 = arith.constant dense<0.000000e+00> : vector<64x128xf32>
    %35 = tpu.matmul %34, %33, %cst_10 {dimension_numbers = #tpu.dot_dimension_numbers<[1], [0], [0], [1], [0, 0, 1, 1], [], []>} : vector<64x192xbf16>, vector<192x128xbf16>, vector<64x128xf32> -> vector<64x128xf32>
    %c0_11 = arith.constant 0 : index
    %c0_12 = arith.constant 0 : index
    %36 = vector.load %arg3[%c0_11, %c0_12] : memref<64x1xf32, #tpu.memory_space<vmem>>, vector<64x1xf32>
    %37 = vector.broadcast %36 : vector<64x1xf32> to vector<64x128xf32>
    %38 = arith.addf %35, %37 : vector<64x128xf32>
    %39 = vector.extract_strided_slice %38 {offsets = [0, 0], sizes = [32, 128], strides = [1, 1]} : vector<64x128xf32> to vector<32x128xf32>
    %cst_13 = arith.constant 0.000000e+00 : f32
    %40 = vector.broadcast %cst_13 : f32 to vector<32x128xf32>
    %41 = arith.maximumf %39, %40 : vector<32x128xf32>
    %42 = vector.extract_strided_slice %38 {offsets = [32, 0], sizes = [32, 128], strides = [1, 1]} : vector<64x128xf32> to vector<32x128xf32>
    %c1_i32_14 = arith.constant 1 : i32
    %43 = tpu.dynamic_rotate %41 by %c1_i32_14 dim 1 : vector<32x128xf32>, i32 -> vector<32x128xf32>
    %cst_15 = arith.constant 0.000000e+00 : f32
    %44 = vector.broadcast %cst_15 : f32 to vector<32x128xf32>
    %45 = vector.shape_cast %19 : vector<1x128xi1> to vector<1x128xi1>
    %46 = vector.broadcast %45 : vector<1x128xi1> to vector<32x128xi1>
    %47 = arith.select %46, %43, %44 : vector<32x128xi1>, vector<32x128xf32>
    %c2_i32_16 = arith.constant 2 : i32
    %48 = tpu.dynamic_rotate %41 by %c2_i32_16 dim 1 : vector<32x128xf32>, i32 -> vector<32x128xf32>
    %cst_17 = arith.constant 0.000000e+00 : f32
    %49 = vector.broadcast %cst_17 : f32 to vector<32x128xf32>
    %50 = vector.shape_cast %21 : vector<1x128xi1> to vector<1x128xi1>
    %51 = vector.broadcast %50 : vector<1x128xi1> to vector<32x128xi1>
    %52 = arith.select %51, %48, %49 : vector<32x128xi1>, vector<32x128xf32>
    %53 = tpu.concatenate %41, %47, %52 in 0 : vector<32x128xf32>, vector<32x128xf32>, vector<32x128xf32> -> vector<96x128xf32>
    %54 = arith.truncf %53 : vector<96x128xf32> to vector<96x128xbf16>
    %c0_18 = arith.constant 0 : index
    %c0_19 = arith.constant 0 : index
    %55 = vector.load %arg4[%c0_18, %c0_19] : memref<32x96xbf16, #tpu.memory_space<vmem>>, vector<32x96xbf16>
    %cst_20 = arith.constant dense<0.000000e+00> : vector<32x128xf32>
    %56 = tpu.matmul %55, %54, %cst_20 {dimension_numbers = #tpu.dot_dimension_numbers<[1], [0], [0], [1], [0, 0, 1, 1], [], []>} : vector<32x96xbf16>, vector<96x128xbf16>, vector<32x128xf32> -> vector<32x128xf32>
    %c0_21 = arith.constant 0 : index
    %c0_22 = arith.constant 0 : index
    %57 = vector.load %arg5[%c0_21, %c0_22] : memref<32x1xf32, #tpu.memory_space<vmem>>, vector<32x1xf32>
    %58 = vector.broadcast %57 : vector<32x1xf32> to vector<32x128xf32>
    %59 = arith.addf %56, %58 : vector<32x128xf32>
    %cst_23 = arith.constant 0.000000e+00 : f32
    %60 = vector.broadcast %cst_23 : f32 to vector<32x128xf32>
    %61 = arith.maximumf %59, %60 : vector<32x128xf32>
    %62 = arith.addf %61, %42 : vector<32x128xf32>
    %cst_24 = arith.constant 0.000000e+00 : f32
    %63 = vector.broadcast %cst_24 : f32 to vector<32x128xf32>
    %64 = arith.maximumf %62, %63 : vector<32x128xf32>
    %c2_i32_25 = arith.constant 2 : i32
    %65 = vector.broadcast %c2_i32_25 : i32 to vector<1x128xi32>
    %66 = arith.cmpi sge, %16, %65 : vector<1x128xi32>
    %c4_i32 = arith.constant 4 : i32
    %67 = vector.broadcast %c4_i32 : i32 to vector<1x128xi32>
    %68 = arith.cmpi sge, %16, %67 : vector<1x128xi32>
    %c2_i32_26 = arith.constant 2 : i32
    %69 = tpu.dynamic_rotate %64 by %c2_i32_26 dim 1 : vector<32x128xf32>, i32 -> vector<32x128xf32>
    %cst_27 = arith.constant 0.000000e+00 : f32
    %70 = vector.broadcast %cst_27 : f32 to vector<32x128xf32>
    %71 = vector.shape_cast %66 : vector<1x128xi1> to vector<1x128xi1>
    %72 = vector.broadcast %71 : vector<1x128xi1> to vector<32x128xi1>
    %73 = arith.select %72, %69, %70 : vector<32x128xi1>, vector<32x128xf32>
    %c4_i32_28 = arith.constant 4 : i32
    %74 = tpu.dynamic_rotate %64 by %c4_i32_28 dim 1 : vector<32x128xf32>, i32 -> vector<32x128xf32>
    %cst_29 = arith.constant 0.000000e+00 : f32
    %75 = vector.broadcast %cst_29 : f32 to vector<32x128xf32>
    %76 = vector.shape_cast %68 : vector<1x128xi1> to vector<1x128xi1>
    %77 = vector.broadcast %76 : vector<1x128xi1> to vector<32x128xi1>
    %78 = arith.select %77, %74, %75 : vector<32x128xi1>, vector<32x128xf32>
    %79 = tpu.concatenate %64, %73, %78 in 0 : vector<32x128xf32>, vector<32x128xf32>, vector<32x128xf32> -> vector<96x128xf32>
    %80 = arith.truncf %79 : vector<96x128xf32> to vector<96x128xbf16>
    %c0_30 = arith.constant 0 : index
    %c0_31 = arith.constant 0 : index
    %81 = vector.load %arg6[%c0_30, %c0_31] : memref<32x96xbf16, #tpu.memory_space<vmem>>, vector<32x96xbf16>
    %cst_32 = arith.constant dense<0.000000e+00> : vector<32x128xf32>
    %82 = tpu.matmul %81, %80, %cst_32 {dimension_numbers = #tpu.dot_dimension_numbers<[1], [0], [0], [1], [0, 0, 1, 1], [], []>} : vector<32x96xbf16>, vector<96x128xbf16>, vector<32x128xf32> -> vector<32x128xf32>
    %c0_33 = arith.constant 0 : index
    %c0_34 = arith.constant 0 : index
    %83 = vector.load %arg7[%c0_33, %c0_34] : memref<32x1xf32, #tpu.memory_space<vmem>>, vector<32x1xf32>
    %84 = vector.broadcast %83 : vector<32x1xf32> to vector<32x128xf32>
    %85 = arith.addf %82, %84 : vector<32x128xf32>
    %cst_35 = arith.constant 0.000000e+00 : f32
    %86 = vector.broadcast %cst_35 : f32 to vector<32x128xf32>
    %87 = arith.maximumf %85, %86 : vector<32x128xf32>
    %88 = arith.truncf %64 : vector<32x128xf32> to vector<32x128xbf16>
    %89 = arith.extf %88 : vector<32x128xbf16> to vector<32x128xf32>
    %c2_i32_36 = arith.constant 2 : i32
    %90 = tpu.dynamic_rotate %87 by %c2_i32_36 dim 1 : vector<32x128xf32>, i32 -> vector<32x128xf32>
    %cst_37 = arith.constant 0.000000e+00 : f32
    %91 = vector.broadcast %cst_37 : f32 to vector<32x128xf32>
    %92 = vector.shape_cast %66 : vector<1x128xi1> to vector<1x128xi1>
    %93 = vector.broadcast %92 : vector<1x128xi1> to vector<32x128xi1>
    %94 = arith.select %93, %90, %91 : vector<32x128xi1>, vector<32x128xf32>
    %c4_i32_38 = arith.constant 4 : i32
    %95 = tpu.dynamic_rotate %87 by %c4_i32_38 dim 1 : vector<32x128xf32>, i32 -> vector<32x128xf32>
    %cst_39 = arith.constant 0.000000e+00 : f32
    %96 = vector.broadcast %cst_39 : f32 to vector<32x128xf32>
    %97 = vector.shape_cast %68 : vector<1x128xi1> to vector<1x128xi1>
    %98 = vector.broadcast %97 : vector<1x128xi1> to vector<32x128xi1>
    %99 = arith.select %98, %95, %96 : vector<32x128xi1>, vector<32x128xf32>
    %100 = tpu.concatenate %87, %94, %99 in 0 : vector<32x128xf32>, vector<32x128xf32>, vector<32x128xf32> -> vector<96x128xf32>
    %101 = arith.truncf %100 : vector<96x128xf32> to vector<96x128xbf16>
    %c0_40 = arith.constant 0 : index
    %c0_41 = arith.constant 0 : index
    %102 = vector.load %arg8[%c0_40, %c0_41] : memref<32x96xbf16, #tpu.memory_space<vmem>>, vector<32x96xbf16>
    %cst_42 = arith.constant dense<0.000000e+00> : vector<32x128xf32>
    %103 = tpu.matmul %102, %101, %cst_42 {dimension_numbers = #tpu.dot_dimension_numbers<[1], [0], [0], [1], [0, 0, 1, 1], [], []>} : vector<32x96xbf16>, vector<96x128xbf16>, vector<32x128xf32> -> vector<32x128xf32>
    %c0_43 = arith.constant 0 : index
    %c0_44 = arith.constant 0 : index
    %104 = vector.load %arg9[%c0_43, %c0_44] : memref<32x1xf32, #tpu.memory_space<vmem>>, vector<32x1xf32>
    %105 = vector.broadcast %104 : vector<32x1xf32> to vector<32x128xf32>
    %106 = arith.addf %103, %105 : vector<32x128xf32>
    %cst_45 = arith.constant 0.000000e+00 : f32
    %107 = vector.broadcast %cst_45 : f32 to vector<32x128xf32>
    %108 = arith.maximumf %106, %107 : vector<32x128xf32>
    %109 = arith.addf %108, %89 : vector<32x128xf32>
    %cst_46 = arith.constant 0.000000e+00 : f32
    %110 = vector.broadcast %cst_46 : f32 to vector<32x128xf32>
    %111 = arith.maximumf %109, %110 : vector<32x128xf32>
    %c4_i32_47 = arith.constant 4 : i32
    %112 = vector.broadcast %c4_i32_47 : i32 to vector<1x128xi32>
    %113 = arith.cmpi sge, %16, %112 : vector<1x128xi32>
    %c8_i32 = arith.constant 8 : i32
    %114 = vector.broadcast %c8_i32 : i32 to vector<1x128xi32>
    %115 = arith.cmpi sge, %16, %114 : vector<1x128xi32>
    %c4_i32_48 = arith.constant 4 : i32
    %116 = tpu.dynamic_rotate %111 by %c4_i32_48 dim 1 : vector<32x128xf32>, i32 -> vector<32x128xf32>
    %cst_49 = arith.constant 0.000000e+00 : f32
    %117 = vector.broadcast %cst_49 : f32 to vector<32x128xf32>
    %118 = vector.shape_cast %113 : vector<1x128xi1> to vector<1x128xi1>
    %119 = vector.broadcast %118 : vector<1x128xi1> to vector<32x128xi1>
    %120 = arith.select %119, %116, %117 : vector<32x128xi1>, vector<32x128xf32>
    %c8_i32_50 = arith.constant 8 : i32
    %121 = tpu.dynamic_rotate %111 by %c8_i32_50 dim 1 : vector<32x128xf32>, i32 -> vector<32x128xf32>
    %cst_51 = arith.constant 0.000000e+00 : f32
    %122 = vector.broadcast %cst_51 : f32 to vector<32x128xf32>
    %123 = vector.shape_cast %115 : vector<1x128xi1> to vector<1x128xi1>
    %124 = vector.broadcast %123 : vector<1x128xi1> to vector<32x128xi1>
    %125 = arith.select %124, %121, %122 : vector<32x128xi1>, vector<32x128xf32>
    %126 = tpu.concatenate %111, %120, %125 in 0 : vector<32x128xf32>, vector<32x128xf32>, vector<32x128xf32> -> vector<96x128xf32>
    %127 = arith.truncf %126 : vector<96x128xf32> to vector<96x128xbf16>
    %c0_52 = arith.constant 0 : index
    %c0_53 = arith.constant 0 : index
    %128 = vector.load %arg10[%c0_52, %c0_53] : memref<32x96xbf16, #tpu.memory_space<vmem>>, vector<32x96xbf16>
    %cst_54 = arith.constant dense<0.000000e+00> : vector<32x128xf32>
    %129 = tpu.matmul %128, %127, %cst_54 {dimension_numbers = #tpu.dot_dimension_numbers<[1], [0], [0], [1], [0, 0, 1, 1], [], []>} : vector<32x96xbf16>, vector<96x128xbf16>, vector<32x128xf32> -> vector<32x128xf32>
    %c0_55 = arith.constant 0 : index
    %c0_56 = arith.constant 0 : index
    %130 = vector.load %arg11[%c0_55, %c0_56] : memref<32x1xf32, #tpu.memory_space<vmem>>, vector<32x1xf32>
    %131 = vector.broadcast %130 : vector<32x1xf32> to vector<32x128xf32>
    %132 = arith.addf %129, %131 : vector<32x128xf32>
    %cst_57 = arith.constant 0.000000e+00 : f32
    %133 = vector.broadcast %cst_57 : f32 to vector<32x128xf32>
    %134 = arith.maximumf %132, %133 : vector<32x128xf32>
    %135 = arith.truncf %111 : vector<32x128xf32> to vector<32x128xbf16>
    %136 = arith.extf %135 : vector<32x128xbf16> to vector<32x128xf32>
    %c4_i32_58 = arith.constant 4 : i32
    %137 = tpu.dynamic_rotate %134 by %c4_i32_58 dim 1 : vector<32x128xf32>, i32 -> vector<32x128xf32>
    %cst_59 = arith.constant 0.000000e+00 : f32
    %138 = vector.broadcast %cst_59 : f32 to vector<32x128xf32>
    %139 = vector.shape_cast %113 : vector<1x128xi1> to vector<1x128xi1>
    %140 = vector.broadcast %139 : vector<1x128xi1> to vector<32x128xi1>
    %141 = arith.select %140, %137, %138 : vector<32x128xi1>, vector<32x128xf32>
    %c8_i32_60 = arith.constant 8 : i32
    %142 = tpu.dynamic_rotate %134 by %c8_i32_60 dim 1 : vector<32x128xf32>, i32 -> vector<32x128xf32>
    %cst_61 = arith.constant 0.000000e+00 : f32
    %143 = vector.broadcast %cst_61 : f32 to vector<32x128xf32>
    %144 = vector.shape_cast %115 : vector<1x128xi1> to vector<1x128xi1>
    %145 = vector.broadcast %144 : vector<1x128xi1> to vector<32x128xi1>
    %146 = arith.select %145, %142, %143 : vector<32x128xi1>, vector<32x128xf32>
    %147 = tpu.concatenate %134, %141, %146 in 0 : vector<32x128xf32>, vector<32x128xf32>, vector<32x128xf32> -> vector<96x128xf32>
    %148 = arith.truncf %147 : vector<96x128xf32> to vector<96x128xbf16>
    %c0_62 = arith.constant 0 : index
    %c0_63 = arith.constant 0 : index
    %149 = vector.load %arg12[%c0_62, %c0_63] : memref<32x96xbf16, #tpu.memory_space<vmem>>, vector<32x96xbf16>
    %cst_64 = arith.constant dense<0.000000e+00> : vector<32x128xf32>
    %150 = tpu.matmul %149, %148, %cst_64 {dimension_numbers = #tpu.dot_dimension_numbers<[1], [0], [0], [1], [0, 0, 1, 1], [], []>} : vector<32x96xbf16>, vector<96x128xbf16>, vector<32x128xf32> -> vector<32x128xf32>
    %c0_65 = arith.constant 0 : index
    %c0_66 = arith.constant 0 : index
    %151 = vector.load %arg13[%c0_65, %c0_66] : memref<32x1xf32, #tpu.memory_space<vmem>>, vector<32x1xf32>
    %152 = vector.broadcast %151 : vector<32x1xf32> to vector<32x128xf32>
    %153 = arith.addf %150, %152 : vector<32x128xf32>
    %cst_67 = arith.constant 0.000000e+00 : f32
    %154 = vector.broadcast %cst_67 : f32 to vector<32x128xf32>
    %155 = arith.maximumf %153, %154 : vector<32x128xf32>
    %156 = arith.addf %155, %136 : vector<32x128xf32>
    %cst_68 = arith.constant 0.000000e+00 : f32
    %157 = vector.broadcast %cst_68 : f32 to vector<32x128xf32>
    %158 = arith.maximumf %156, %157 : vector<32x128xf32>
    %c0_69 = arith.constant 0 : index
    %c0_70 = arith.constant 0 : index
    %159 = vector.load %arg14[%c0_69, %c0_70] : memref<8x32xf32, #tpu.memory_space<vmem>>, vector<8x32xf32>
    %cst_71 = arith.constant dense<0.000000e+00> : vector<8x128xf32>
    %160 = tpu.matmul %159, %158, %cst_71 {dimension_numbers = #tpu.dot_dimension_numbers<[1], [0], [0], [1], [0, 0, 1, 1], [], []>} : vector<8x32xf32>, vector<32x128xf32>, vector<8x128xf32> -> vector<8x128xf32>
    %c0_72 = arith.constant 0 : index
    %c0_73 = arith.constant 0 : index
    %161 = vector.load %arg15[%c0_72, %c0_73] : memref<8x1xf32, #tpu.memory_space<vmem>>, vector<8x1xf32>
    %162 = vector.broadcast %161 : vector<8x1xf32> to vector<8x128xf32>
    %163 = arith.addf %160, %162 : vector<8x128xf32>
    %c0_74 = arith.constant 0 : index
    %c0_75 = arith.constant 0 : index
    %164 = vector.load %arg16[%c0_74, %c0_75] : memref<8x128xf32, #tpu.memory_space<vmem>>, vector<8x128xf32>
    tpu.vector_store %arg16[%c0_74, %c0_75], %163 {strides = array<i32>} : memref<8x128xf32, #tpu.memory_space<vmem>>, vector<8x128xf32>,
    return
  }
  func.func @transform_0(%arg0: i32) -> (i32, i32) {
    %c0_i32 = arith.constant 0 : i32
    %c0_i32_0 = arith.constant 0 : i32
    return %c0_i32, %arg0 : i32, i32
  }
  func.func @transform_1(%arg0: i32) -> (i32, i32) {
    %c0_i32 = arith.constant 0 : i32
    %c0_i32_0 = arith.constant 0 : i32
    %c0_i32_1 = arith.constant 0 : i32
    return %c0_i32, %c0_i32_0 : i32, i32
  }
  func.func @transform_2(%arg0: i32) -> (i32, i32) {
    %c0_i32 = arith.constant 0 : i32
    %c0_i32_0 = arith.constant 0 : i32
    %c0_i32_1 = arith.constant 0 : i32
    return %c0_i32, %c0_i32_0 : i32, i32
  }
  func.func @transform_3(%arg0: i32) -> (i32, i32) {
    %c0_i32 = arith.constant 0 : i32
    %c0_i32_0 = arith.constant 0 : i32
    %c0_i32_1 = arith.constant 0 : i32
    return %c0_i32, %c0_i32_0 : i32, i32
  }
  func.func @transform_4(%arg0: i32) -> (i32, i32) {
    %c0_i32 = arith.constant 0 : i32
    %c0_i32_0 = arith.constant 0 : i32
    %c0_i32_1 = arith.constant 0 : i32
    return %c0_i32, %c0_i32_0 : i32, i32
  }
  func.func @transform_5(%arg0: i32) -> (i32, i32) {
    %c0_i32 = arith.constant 0 : i32
    %c0_i32_0 = arith.constant 0 : i32
    %c0_i32_1 = arith.constant 0 : i32
    return %c0_i32, %c0_i32_0 : i32, i32
  }
  func.func @transform_6(%arg0: i32) -> (i32, i32) {
    %c0_i32 = arith.constant 0 : i32
    %c0_i32_0 = arith.constant 0 : i32
    %c0_i32_1 = arith.constant 0 : i32
    return %c0_i32, %c0_i32_0 : i32, i32
  }
  func.func @transform_7(%arg0: i32) -> (i32, i32) {
    %c0_i32 = arith.constant 0 : i32
    %c0_i32_0 = arith.constant 0 : i32
    %c0_i32_1 = arith.constant 0 : i32
    return %c0_i32, %c0_i32_0 : i32, i32
  }
  func.func @transform_8(%arg0: i32) -> (i32, i32) {
    %c0_i32 = arith.constant 0 : i32
    %c0_i32_0 = arith.constant 0 : i32
    %c0_i32_1 = arith.constant 0 : i32
    return %c0_i32, %c0_i32_0 : i32, i32
  }
  func.func @transform_9(%arg0: i32) -> (i32, i32) {
    %c0_i32 = arith.constant 0 : i32
    %c0_i32_0 = arith.constant 0 : i32
    %c0_i32_1 = arith.constant 0 : i32
    return %c0_i32, %c0_i32_0 : i32, i32
  }
  func.func @transform_10(%arg0: i32) -> (i32, i32) {
    %c0_i32 = arith.constant 0 : i32
    %c0_i32_0 = arith.constant 0 : i32
    %c0_i32_1 = arith.constant 0 : i32
    return %c0_i32, %c0_i32_0 : i32, i32
  }
  func.func @transform_11(%arg0: i32) -> (i32, i32) {
    %c0_i32 = arith.constant 0 : i32
    %c0_i32_0 = arith.constant 0 : i32
    %c0_i32_1 = arith.constant 0 : i32
    return %c0_i32, %c0_i32_0 : i32, i32
  }
  func.func @transform_12(%arg0: i32) -> (i32, i32) {
    %c0_i32 = arith.constant 0 : i32
    %c0_i32_0 = arith.constant 0 : i32
    %c0_i32_1 = arith.constant 0 : i32
    return %c0_i32, %c0_i32_0 : i32, i32
  }
  func.func @transform_13(%arg0: i32) -> (i32, i32) {
    %c0_i32 = arith.constant 0 : i32
    %c0_i32_0 = arith.constant 0 : i32
    %c0_i32_1 = arith.constant 0 : i32
    return %c0_i32, %c0_i32_0 : i32, i32
  }
  func.func @transform_14(%arg0: i32) -> (i32, i32) {
    %c0_i32 = arith.constant 0 : i32
    %c0_i32_0 = arith.constant 0 : i32
    %c0_i32_1 = arith.constant 0 : i32
    return %c0_i32, %c0_i32_0 : i32, i32
  }
  func.func @transform_15(%arg0: i32) -> (i32, i32) {
    %c0_i32 = arith.constant 0 : i32
    %c0_i32_0 = arith.constant 0 : i32
    return %c0_i32, %arg0 : i32, i32
  }
}

</mosaic_0001>

<llo_original>
// kernel: tpu_custom_call.1
$region0: #{tpu_custom_call.1}
  #allocation0 [shape = 'u32[]', space=smem, size = 0x4, offset = 0x4, fixed_abs, tag = 'smem constant byte address 0x4 - core index']
  #allocation1 [shape = 'u32[72,128]{1,0:T(1,128)}', space=vmem, size = 0x9000, scoped, tag = 'internal scratch']
  %s0 = inlined_call_operand.vmem [shape: f32[64,128], index: 0, kind: input, shape index: {}]
  %s1 = inlined_call_operand.vmem [shape: bf16[64,192], index: 1, kind: input, shape index: {}]
  %s2 = inlined_call_operand.vmem [shape: f32[64,1], index: 2, kind: input, shape index: {}]
  %s3 = inlined_call_operand.vmem [shape: bf16[32,96], index: 3, kind: input, shape index: {}]
  %s4 = inlined_call_operand.vmem [shape: f32[32,1], index: 4, kind: input, shape index: {}]
  %s5 = inlined_call_operand.vmem [shape: bf16[32,96], index: 5, kind: input, shape index: {}]
  %s6 = inlined_call_operand.vmem [shape: f32[32,1], index: 6, kind: input, shape index: {}]
  %s7 = inlined_call_operand.vmem [shape: bf16[32,96], index: 7, kind: input, shape index: {}]
  %s8 = inlined_call_operand.vmem [shape: f32[32,1], index: 8, kind: input, shape index: {}]
  %s9 = inlined_call_operand.vmem [shape: bf16[32,96], index: 9, kind: input, shape index: {}]
  %s10 = inlined_call_operand.vmem [shape: f32[32,1], index: 10, kind: input, shape index: {}]
  %s11 = inlined_call_operand.vmem [shape: bf16[32,96], index: 11, kind: input, shape index: {}]
  %s12 = inlined_call_operand.vmem [shape: f32[32,1], index: 12, kind: input, shape index: {}]
  %s13 = inlined_call_operand.vmem [shape: f32[8,32], index: 13, kind: input, shape index: {}]
  %s14 = inlined_call_operand.vmem [shape: f32[8,1], index: 14, kind: input, shape index: {}]
  %s15 = inlined_call_operand.hbm [shape: f32[8,128], index: 15, kind: output, shape index: {}]
  %s16 = sld [smem:[#allocation0]]
  $region70: #{tpu_custom_call.1} parent=0
    _
  %s18 = ssub.s32 1, %s16
  %s19 = scalar_select 0, %s18, %s16
  $region1: #{tpu_custom_call.1} parent=0
    #allocation2 [shape = 'u8[4096]{0}', space=vmem, size = 0x1000, scoped, tag = 'output window, operand 0, single buffered']
    #allocation3 [shape = 's32[1]{0}', space=sflag, size = 0x4, scoped, tag = 'scoped memory for tpu_custom_call.1']
    %20 = vsyncpa [#allocation3], 0
    // Predicated region
    $region2: #{tpu_custom_call.1} parent=1 // pred_check
      _
    $region3: #{tpu_custom_call.1} parent=1 // pred_check_branch
      %22 = sbr.rel (0) target = $region5
    $region4: #{tpu_custom_call.1} parent=1 // pred_region
      _
    $region5: #{tpu_custom_call.1} parent=1 // pred_fallthru
      _
    // Predicated region
    $region6: #{tpu_custom_call.1} parent=1 // pred_check
      _
    $region7: #{tpu_custom_call.1} parent=1 // pred_check_branch
      %24 = sbr.rel (0) target = $region9
    $region8: #{tpu_custom_call.1} parent=1 // pred_region
      _
    $region9: #{tpu_custom_call.1} parent=1 // pred_fallthru
      _
    // Predicated region
    $region10: #{tpu_custom_call.1} parent=1 // pred_check
      _
    $region11: #{tpu_custom_call.1} parent=1 // pred_check_branch
      %26 = sbr.rel (0) target = $region13
    $region12: #{tpu_custom_call.1} parent=1 // pred_region
      _
    $region13: #{tpu_custom_call.1} parent=1 // pred_fallthru
      _
    // Predicated region
    $region14: #{tpu_custom_call.1} parent=1 // pred_check
      _
    $region15: #{tpu_custom_call.1} parent=1 // pred_check_branch
      %28 = sbr.rel (0) target = $region17
    $region16: #{tpu_custom_call.1} parent=1 // pred_region
      _
    $region17: #{tpu_custom_call.1} parent=1 // pred_fallthru
      _
    // Predicated region
    $region18: #{tpu_custom_call.1} parent=1 // pred_check
      _
    $region19: #{tpu_custom_call.1} parent=1 // pred_check_branch
      %30 = sbr.rel (0) target = $region21
    $region20: #{tpu_custom_call.1} parent=1 // pred_region
      _
    $region21: #{tpu_custom_call.1} parent=1 // pred_fallthru
      _
    // Predicated region
    $region22: #{tpu_custom_call.1} parent=1 // pred_check
      _
    $region23: #{tpu_custom_call.1} parent=1 // pred_check_branch
      %32 = sbr.rel (0) target = $region25
    $region24: #{tpu_custom_call.1} parent=1 // pred_region
      _
    $region25: #{tpu_custom_call.1} parent=1 // pred_fallthru
      _
    // Predicated region
    $region26: #{tpu_custom_call.1} parent=1 // pred_check
      _
    $region27: #{tpu_custom_call.1} parent=1 // pred_check_branch
      %34 = sbr.rel (0) target = $region29
    $region28: #{tpu_custom_call.1} parent=1 // pred_region
      _
    $region29: #{tpu_custom_call.1} parent=1 // pred_fallthru
      _
    // Predicated region
    $region30: #{tpu_custom_call.1} parent=1 // pred_check
      _
    $region31: #{tpu_custom_call.1} parent=1 // pred_check_branch
      %36 = sbr.rel (0) target = $region33
    $region32: #{tpu_custom_call.1} parent=1 // pred_region
      _
    $region33: #{tpu_custom_call.1} parent=1 // pred_fallthru
      _
    // Predicated region
    $region34: #{tpu_custom_call.1} parent=1 // pred_check
      _
    $region35: #{tpu_custom_call.1} parent=1 // pred_check_branch
      %38 = sbr.rel (0) target = $region37
    $region36: #{tpu_custom_call.1} parent=1 // pred_region
      _
    $region37: #{tpu_custom_call.1} parent=1 // pred_fallthru
      _
    // Predicated region
    $region38: #{tpu_custom_call.1} parent=1 // pred_check
      _
    $region39: #{tpu_custom_call.1} parent=1 // pred_check_branch
      %40 = sbr.rel (0) target = $region41
    $region40: #{tpu_custom_call.1} parent=1 // pred_region
      _
    $region41: #{tpu_custom_call.1} parent=1 // pred_fallthru
      _
    // Predicated region
    $region42: #{tpu_custom_call.1} parent=1 // pred_check
      _
    $region43: #{tpu_custom_call.1} parent=1 // pred_check_branch
      %42 = sbr.rel (0) target = $region45
    $region44: #{tpu_custom_call.1} parent=1 // pred_region
      _
    $region45: #{tpu_custom_call.1} parent=1 // pred_fallthru
      _
    // Predicated region
    $region46: #{tpu_custom_call.1} parent=1 // pred_check
      _
    $region47: #{tpu_custom_call.1} parent=1 // pred_check_branch
      %44 = sbr.rel (0) target = $region49
    $region48: #{tpu_custom_call.1} parent=1 // pred_region
      _
    $region49: #{tpu_custom_call.1} parent=1 // pred_fallthru
      _
    // Predicated region
    $region50: #{tpu_custom_call.1} parent=1 // pred_check
      _
    $region51: #{tpu_custom_call.1} parent=1 // pred_check_branch
      %46 = sbr.rel (0) target = $region53
    $region52: #{tpu_custom_call.1} parent=1 // pred_region
      _
    $region53: #{tpu_custom_call.1} parent=1 // pred_fallthru
      _
    // Predicated region
    $region54: #{tpu_custom_call.1} parent=1 // pred_check
      _
    $region55: #{tpu_custom_call.1} parent=1 // pred_check_branch
      %48 = sbr.rel (0) target = $region57
    $region56: #{tpu_custom_call.1} parent=1 // pred_region
      _
    $region57: #{tpu_custom_call.1} parent=1 // pred_fallthru
      _
    // Predicated region
    $region58: #{tpu_custom_call.1} parent=1 // pred_check
      _
    $region59: #{tpu_custom_call.1} parent=1 // pred_check_branch
      %50 = sbr.rel (0) target = $region61
    $region60: #{tpu_custom_call.1} parent=1 // pred_region
      _
    $region61: #{tpu_custom_call.1} parent=1 // pred_fallthru
      _
    %v52 = vlaneseq
    %v53 = vand.u32 %v52, 127
    %vm54 = vcmp.lt.s32.totalorder %v53, 0
    %v55 = vsub.s32 0, %v53
    %v56 = vsel %vm54, %v55, %v53
    %v57 = vshrl.u32 %v56, 4
    %v58 = vand.u32 %v56, 15
    %v59 = vsub.s32 0, %v58
    %v60 = vsel %vm54, %v59, %v58
    %vm61 = vcmp.ne.s32.totalorder %v60, 0
    %vm62 = vcmp.lt.s32.totalorder %v60, 0
    %vm63 = vmand %vm62, %vm61
    %v64 = vadd.s32 %v60, 16
    %v65 = vsel %vm63, %v64, %v60
    %v66 = vld [vmem:[%s0] sm:$0xff]
    %v67 = vld [vmem:[%s0 + $0x8] sm:$0xff]
    %v68 = vld [vmem:[%s0 + $0x10] sm:$0xff]
    %v69 = vld [vmem:[%s0 + $0x18] sm:$0xff]
    %v70 = vld [vmem:[%s0 + $0x20] sm:$0xff]
    %v71 = vld [vmem:[%s0 + $0x28] sm:$0xff]
    %v72 = vld [vmem:[%s0 + $0x30] sm:$0xff]
    %v73 = vld [vmem:[%s0 + $0x38] sm:$0xff]
    %vm74 = vcmp.ge.s32.totalorder %v65, 1
    %vm75 = vcmp.ge.s32.totalorder %v65, 2
    %76 = vrot.lane.b32.xlu0 %v66, 1
    %v77 = vpop.permute.xlu0 %76
    %78 = vrot.lane.b32.xlu0 %v67, 1
    %v79 = vpop.permute.xlu0 %78
    %80 = vrot.lane.b32.xlu0 %v68, 1
    %v81 = vpop.permute.xlu0 %80
    %82 = vrot.lane.b32.xlu0 %v69, 1
    %v83 = vpop.permute.xlu0 %82
    %84 = vrot.lane.b32.xlu0 %v70, 1
    %v85 = vpop.permute.xlu0 %84
    %86 = vrot.lane.b32.xlu0 %v71, 1
    %v87 = vpop.permute.xlu0 %86
    %88 = vrot.lane.b32.xlu0 %v72, 1
    %v89 = vpop.permute.xlu0 %88
    %90 = vrot.lane.b32.xlu0 %v73, 1
    %v91 = vpop.permute.xlu0 %90
    %v92 = vsel %vm74, 1, 0
    %vm93 = vcmp.eq.s32.totalorder %v92, 1
    %v94 = vsel %vm93, %v77, 0.0
    %v95 = vsel %vm93, %v79, 0.0
    %v96 = vsel %vm93, %v81, 0.0
    %v97 = vsel %vm93, %v83, 0.0
    %v98 = vsel %vm93, %v85, 0.0
    %v99 = vsel %vm93, %v87, 0.0
    %v100 = vsel %vm93, %v89, 0.0
    %v101 = vsel %vm93, %v91, 0.0
    %102 = vrot.lane.b32.xlu0 %v66, 2
    %v103 = vpop.permute.xlu0 %102
    %104 = vrot.lane.b32.xlu0 %v67, 2
    %v105 = vpop.permute.xlu0 %104
    %106 = vrot.lane.b32.xlu0 %v68, 2
    %v107 = vpop.permute.xlu0 %106
    %108 = vrot.lane.b32.xlu0 %v69, 2
    %v109 = vpop.permute.xlu0 %108
    %110 = vrot.lane.b32.xlu0 %v70, 2
    %v111 = vpop.permute.xlu0 %110
    %112 = vrot.lane.b32.xlu0 %v71, 2
    %v113 = vpop.permute.xlu0 %112
    %114 = vrot.lane.b32.xlu0 %v72, 2
    %v115 = vpop.permute.xlu0 %114
    %116 = vrot.lane.b32.xlu0 %v73, 2
    %v117 = vpop.permute.xlu0 %116
    %v118 = vsel %vm75, 1, 0
    %vm119 = vcmp.eq.s32.totalorder %v118, 1
    %v120 = vsel %vm119, %v103, 0.0
    %v121 = vsel %vm119, %v105, 0.0
    %v122 = vsel %vm119, %v107, 0.0
    %v123 = vsel %vm119, %v109, 0.0
    %v124 = vsel %vm119, %v111, 0.0
    %v125 = vsel %vm119, %v113, 0.0
    %v126 = vsel %vm119, %v115, 0.0
    %v127 = vsel %vm119, %v117, 0.0
    %v128 = vpack.c.bf16 %v67, %v66
    %v129 = vpack.c.bf16 %v69, %v68
    %v130 = vpack.c.bf16 %v71, %v70
    %v131 = vpack.c.bf16 %v73, %v72
    %v132 = vpack.c.bf16 %v95, %v94
    %v133 = vpack.c.bf16 %v97, %v96
    %v134 = vpack.c.bf16 %v99, %v98
    %v135 = vpack.c.bf16 %v101, %v100
    %v136 = vpack.c.bf16 %v121, %v120
    %v137 = vpack.c.bf16 %v123, %v122
    %v138 = vpack.c.bf16 %v125, %v124
    %v139 = vpack.c.bf16 %v127, %v126
    %v140 = vld [vmem:[%s1] sm:$0xff]
    %v141 = vld [vmem:[%s1 + $0x8] sm:$0xff]
    %v142 = vld [vmem:[%s1 + $0x10] sm:$0xff]
    %v143 = vld [vmem:[%s1 + $0x18] sm:$0xff]
    %v144 = vld [vmem:[%s1 + $0x20] sm:$0xff]
    %v145 = vld [vmem:[%s1 + $0x28] sm:$0xff]
    %v146 = vld [vmem:[%s1 + $0x30] sm:$0xff]
    %v147 = vld [vmem:[%s1 + $0x38] sm:$0xff]
    %v148 = vld [vmem:[%s2] sm:$0xff]
    %v149 = vld [vmem:[%s2 + $0x8] sm:$0xff]
    %v150 = vld [vmem:[%s2 + $0x10] sm:$0xff]
    %v151 = vld [vmem:[%s2 + $0x18] sm:$0xff]
    %v152 = vld [vmem:[%s2 + $0x20] sm:$0xff]
    %v153 = vld [vmem:[%s2 + $0x28] sm:$0xff]
    %v154 = vld [vmem:[%s2 + $0x30] sm:$0xff]
    %v155 = vld [vmem:[%s2 + $0x38] sm:$0xff]
    %157 = vset.pattern.permute.xlu0 0
    %158 = vperm.xlu0 %157, %v148
    %v159 = vpop.permute.xlu0 %158
    %162 = vset.pattern.permute.xlu0 0
    %163 = vperm.xlu0 %162, %v149
    %v164 = vpop.permute.xlu0 %163
    %167 = vset.pattern.permute.xlu0 0
    %168 = vperm.xlu0 %167, %v150
    %v169 = vpop.permute.xlu0 %168
    %172 = vset.pattern.permute.xlu0 0
    %173 = vperm.xlu0 %172, %v151
    %v174 = vpop.permute.xlu0 %173
    %177 = vset.pattern.permute.xlu0 0
    %178 = vperm.xlu0 %177, %v152
    %v179 = vpop.permute.xlu0 %178
    %182 = vset.pattern.permute.xlu0 0
    %183 = vperm.xlu0 %182, %v153
    %v184 = vpop.permute.xlu0 %183
    %187 = vset.pattern.permute.xlu0 0
    %188 = vperm.xlu0 %187, %v154
    %v189 = vpop.permute.xlu0 %188
    %192 = vset.pattern.permute.xlu0 0
    %193 = vperm.xlu0 %192, %v155
    %v194 = vpop.permute.xlu0 %193
    %v204 = vunpack.c.l.b16 %v140
    %v205 = vunpack.c.h.b16 %v140
    %v206 = vunpack.c.l.b16 %v141
    %v207 = vunpack.c.h.b16 %v141
    %v208 = vunpack.c.l.b16 %v142
    %v209 = vunpack.c.h.b16 %v142
    %v210 = vunpack.c.l.b16 %v143
    %v211 = vunpack.c.h.b16 %v143
    %v212 = vunpack.c.l.b16 %v144
    %v213 = vunpack.c.h.b16 %v144
    %v214 = vunpack.c.l.b16 %v145
    %v215 = vunpack.c.h.b16 %v145
    %v216 = vunpack.c.l.b16 %v146
    %v217 = vunpack.c.h.b16 %v146
    %v218 = vunpack.c.l.b16 %v147
    %v219 = vunpack.c.h.b16 %v147
    %v220 = vpack.c.b16 %v206, %v204
    %v221 = vpack.c.b16 %v207, %v205
    %v222 = vpack.c.b16 %v210, %v208
    %v223 = vpack.c.b16 %v211, %v209
    %v224 = vpack.c.b16 %v214, %v212
    %v225 = vpack.c.b16 %v215, %v213
    %v226 = vpack.c.b16 %v218, %v216
    %v227 = vpack.c.b16 %v219, %v217
    %vm232 = vcmask 523264
    %v234 = vsel %vm232, %v221, 0
    %v237 = vsel %vm232, %v223, 0
    %v240 = vsel %vm232, %v225, 0
    %v243 = vsel %vm232, %v227, 0
    %245 = vmatpush.bf16.msra.mxu0 %v135
    %246 = vmatpush.bf16.msra.mxu0 %v134
    %247 = vmatpush.bf16.msra.mxu0 %v133
    %248 = vmatpush.bf16.msra.mxu0 %v132
    %249 = vmatpush.bf16.msra.mxu0 %v131
    %250 = vmatpush.bf16.msra.mxu0 %v130
    %251 = vmatpush.bf16.msra.mxu0 %v129
    %252 = vmatpush.bf16.msra.mxu0 %v128
    %253 = vmatmul.bf16.gmra.mxu0 %v220
    %v254 = vpop.f32.mrf.mxu0
    %v255 = vadd.f32 %v159, %v254
    %v256 = vpop.f32.mrf.mxu0
    %v257 = vadd.f32 %v164, %v256
    %258 = vmatmul.bf16.gmra.mxu0 %v222
    %v259 = vpop.f32.mrf.mxu0
    %v260 = vadd.f32 %v169, %v259
    %v261 = vpop.f32.mrf.mxu0
    %v262 = vadd.f32 %v174, %v261
    %263 = vmatmul.bf16.gmra.mxu0 %v224
    %v264 = vpop.f32.mrf.mxu0
    %v265 = vadd.f32 %v179, %v264
    %v266 = vpop.f32.mrf.mxu0
    %v267 = vadd.f32 %v184, %v266
    %268 = vmatmul.bf16.gmra.mxu0 %v226
    %v269 = vpop.f32.mrf.mxu0
    %v270 = vadd.f32 %v189, %v269
    %v271 = vpop.f32.mrf.mxu0
    %v272 = vadd.f32 %v194, %v271
    %273 = vdwg.mxu0
    %274 = vmatpush.bf16.msra.mxu0 0
    %275 = vmatpush.bf16.msra.mxu0 0
    %276 = vmatpush.bf16.msra.mxu0 0
    %277 = vmatpush.bf16.msra.mxu0 0
    %278 = vmatpush.bf16.msra.mxu0 %v139
    %279 = vmatpush.bf16.msra.mxu0 %v138
    %280 = vmatpush.bf16.msra.mxu0 %v137
    %281 = vmatpush.bf16.msra.mxu0 %v136
    %282 = vmatmul.bf16.gmra.mxu0 %v234
    %v283 = vpop.f32.mrf.mxu0
    %v284 = vadd.f32 %v255, %v283
    %v285 = vpop.f32.mrf.mxu0
    %v286 = vadd.f32 %v257, %v285
    %287 = vmatmul.bf16.gmra.mxu0 %v237
    %v288 = vpop.f32.mrf.mxu0
    %v289 = vadd.f32 %v260, %v288
    %v290 = vpop.f32.mrf.mxu0
    %v291 = vadd.f32 %v262, %v290
    %292 = vmatmul.bf16.gmra.mxu0 %v240
    %v293 = vpop.f32.mrf.mxu0
    %v294 = vadd.f32 %v265, %v293
    %v295 = vpop.f32.mrf.mxu0
    %v296 = vadd.f32 %v267, %v295
    %297 = vmatmul.bf16.gmra.mxu0 %v243
    %v298 = vpop.f32.mrf.mxu0
    %v299 = vadd.f32 %v270, %v298
    %v300 = vpop.f32.mrf.mxu0
    %v301 = vadd.f32 %v272, %v300
    %302 = vdwg.mxu0
    %v303 = vmax.f32 %v284, 0.0
    %v304 = vmax.f32 %v286, 0.0
    %v305 = vmax.f32 %v289, 0.0
    %v306 = vmax.f32 %v291, 0.0
    %307 = vrot.lane.b32.xlu0 %v303, 1
    %v308 = vpop.permute.xlu0 %307
    %309 = vrot.lane.b32.xlu0 %v304, 1
    %v310 = vpop.permute.xlu0 %309
    %311 = vrot.lane.b32.xlu0 %v305, 1
    %v312 = vpop.permute.xlu0 %311
    %313 = vrot.lane.b32.xlu0 %v306, 1
    %v314 = vpop.permute.xlu0 %313
    %v315 = vsel %vm93, %v308, 0.0
    %v316 = vsel %vm93, %v310, 0.0
    %v317 = vsel %vm93, %v312, 0.0
    %v318 = vsel %vm93, %v314, 0.0
    %319 = vrot.lane.b32.xlu0 %v303, 2
    %v320 = vpop.permute.xlu0 %319
    %321 = vrot.lane.b32.xlu0 %v304, 2
    %v322 = vpop.permute.xlu0 %321
    %323 = vrot.lane.b32.xlu0 %v305, 2
    %v324 = vpop.permute.xlu0 %323
    %325 = vrot.lane.b32.xlu0 %v306, 2
    %v326 = vpop.permute.xlu0 %325
    %v327 = vsel %vm119, %v320, 0.0
    %v328 = vsel %vm119, %v322, 0.0
    %v329 = vsel %vm119, %v324, 0.0
    %v330 = vsel %vm119, %v326, 0.0
    %v331 = vpack.c.bf16 %v304, %v303
    %v332 = vpack.c.bf16 %v306, %v305
    %v333 = vpack.c.bf16 %v316, %v315
    %v334 = vpack.c.bf16 %v318, %v317
    %v335 = vpack.c.bf16 %v328, %v327
    %v336 = vpack.c.bf16 %v330, %v329
    %v337 = vld [vmem:[%s3] sm:$0xf]
    %v338 = vld [vmem:[%s3 + $0x4] sm:$0xf]
    %v339 = vld [vmem:[%s3 + $0x8] sm:$0xf]
    %v340 = vld [vmem:[%s3 + $0xc] sm:$0xf]
    %v341 = vld [vmem:[%s4] sm:$0xff]
    %v342 = vld [vmem:[%s4 + $0x8] sm:$0xff]
    %v343 = vld [vmem:[%s4 + $0x10] sm:$0xff]
    %v344 = vld [vmem:[%s4 + $0x18] sm:$0xff]
    %346 = vset.pattern.permute.xlu0 0
    %347 = vperm.xlu0 %346, %v341
    %v348 = vpop.permute.xlu0 %347
    %351 = vset.pattern.permute.xlu0 0
    %352 = vperm.xlu0 %351, %v342
    %v353 = vpop.permute.xlu0 %352
    %356 = vset.pattern.permute.xlu0 0
    %357 = vperm.xlu0 %356, %v343
    %v358 = vpop.permute.xlu0 %357
    %361 = vset.pattern.permute.xlu0 0
    %362 = vperm.xlu0 %361, %v344
    %v363 = vpop.permute.xlu0 %362
    %v369 = vunpack.c.l.b16 %v337
    %v370 = vunpack.c.l.b16 %v338
    %v371 = vunpack.c.l.b16 %v339
    %v372 = vunpack.c.l.b16 %v340
    %v373 = vpack.c.b16 %v370, %v369
    %v374 = vpack.c.b16 %v372, %v371
    %vm375 = vcmask 785408
    %v377 = vsel %vm375, %v373, 0
    %v380 = vsel %vm375, %v374, 0
    %382 = vmatpush.bf16.msra.mxu0 0
    %383 = vmatpush.bf16.msra.mxu0 0
    %384 = vmatpush.bf16.msra.mxu0 %v336
    %385 = vmatpush.bf16.msra.mxu0 %v335
    %386 = vmatpush.bf16.msra.mxu0 %v334
    %387 = vmatpush.bf16.msra.mxu0 %v333
    %388 = vmatpush.bf16.msra.mxu0 %v332
    %389 = vmatpush.bf16.msra.mxu0 %v331
    %390 = vmatmul.bf16.gmra.mxu0 %v377
    %v391 = vpop.f32.mrf.mxu0
    %v392 = vadd.f32 %v348, %v391
    %v393 = vpop.f32.mrf.mxu0
    %v394 = vadd.f32 %v353, %v393
    %395 = vmatmul.bf16.gmra.mxu0 %v380
    %v396 = vpop.f32.mrf.mxu0
    %v397 = vadd.f32 %v358, %v396
    %v398 = vpop.f32.mrf.mxu0
    %v399 = vadd.f32 %v363, %v398
    %400 = vdwg.mxu0
    %v401 = vmax.f32 %v392, 0.0
    %v402 = vmax.f32 %v394, 0.0
    %v403 = vmax.f32 %v397, 0.0
    %v404 = vmax.f32 %v399, 0.0
    %v405 = vadd.f32 %v401, %v294
    %v406 = vadd.f32 %v402, %v296
    %v407 = vadd.f32 %v403, %v299
    %v408 = vadd.f32 %v404, %v301
    %v409 = vmax.f32 %v405, 0.0
    %v410 = vmax.f32 %v406, 0.0
    %v411 = vmax.f32 %v407, 0.0
    %v412 = vmax.f32 %v408, 0.0
    %vm413 = vcmp.ge.s32.totalorder %v65, 4
    %414 = vrot.lane.b32.xlu0 %v409, 2
    %v415 = vpop.permute.xlu0 %414
    %416 = vrot.lane.b32.xlu0 %v410, 2
    %v417 = vpop.permute.xlu0 %416
    %418 = vrot.lane.b32.xlu0 %v411, 2
    %v419 = vpop.permute.xlu0 %418
    %420 = vrot.lane.b32.xlu0 %v412, 2
    %v421 = vpop.permute.xlu0 %420
    %v422 = vsel %vm119, %v415, 0.0
    %v423 = vsel %vm119, %v417, 0.0
    %v424 = vsel %vm119, %v419, 0.0
    %v425 = vsel %vm119, %v421, 0.0
    %426 = vrot.lane.b32.xlu0 %v409, 4
    %v427 = vpop.permute.xlu0 %426
    %428 = vrot.lane.b32.xlu0 %v410, 4
    %v429 = vpop.permute.xlu0 %428
    %430 = vrot.lane.b32.xlu0 %v411, 4
    %v431 = vpop.permute.xlu0 %430
    %432 = vrot.lane.b32.xlu0 %v412, 4
    %v433 = vpop.permute.xlu0 %432
    %v434 = vsel %vm413, 1, 0
    %vm435 = vcmp.eq.s32.totalorder %v434, 1
    %v436 = vsel %vm435, %v427, 0.0
    %v437 = vsel %vm435, %v429, 0.0
    %v438 = vsel %vm435, %v431, 0.0
    %v439 = vsel %vm435, %v433, 0.0
    %v440 = vpack.c.bf16 %v410, %v409
    %v441 = vpack.c.bf16 %v412, %v411
    %v442 = vpack.c.bf16 %v423, %v422
    %v443 = vpack.c.bf16 %v425, %v424
    %v444 = vpack.c.bf16 %v437, %v436
    %v445 = vpack.c.bf16 %v439, %v438
    %v446 = vld [vmem:[%s5] sm:$0xf]
    %v447 = vld [vmem:[%s5 + $0x4] sm:$0xf]
    %v448 = vld [vmem:[%s5 + $0x8] sm:$0xf]
    %v449 = vld [vmem:[%s5 + $0xc] sm:$0xf]
    %v450 = vld [vmem:[%s6] sm:$0xff]
    %v451 = vld [vmem:[%s6 + $0x8] sm:$0xff]
    %v452 = vld [vmem:[%s6 + $0x10] sm:$0xff]
    %v453 = vld [vmem:[%s6 + $0x18] sm:$0xff]
    %455 = vset.pattern.permute.xlu0 0
    %456 = vperm.xlu0 %455, %v450
    %v457 = vpop.permute.xlu0 %456
    %460 = vset.pattern.permute.xlu0 0
    %461 = vperm.xlu0 %460, %v451
    %v462 = vpop.permute.xlu0 %461
    %465 = vset.pattern.permute.xlu0 0
    %466 = vperm.xlu0 %465, %v452
    %v467 = vpop.permute.xlu0 %466
    %470 = vset.pattern.permute.xlu0 0
    %471 = vperm.xlu0 %470, %v453
    %v472 = vpop.permute.xlu0 %471
    %v478 = vunpack.c.l.b16 %v446
    %v479 = vunpack.c.l.b16 %v447
    %v480 = vunpack.c.l.b16 %v448
    %v481 = vunpack.c.l.b16 %v449
    %v482 = vpack.c.b16 %v479, %v478
    %v483 = vpack.c.b16 %v481, %v480
    %v485 = vsel %vm375, %v482, 0
    %v488 = vsel %vm375, %v483, 0
    %490 = vmatpush.bf16.msra.mxu0 0
    %491 = vmatpush.bf16.msra.mxu0 0
    %492 = vmatpush.bf16.msra.mxu0 %v445
    %493 = vmatpush.bf16.msra.mxu0 %v444
    %494 = vmatpush.bf16.msra.mxu0 %v443
    %495 = vmatpush.bf16.msra.mxu0 %v442
    %496 = vmatpush.bf16.msra.mxu0 %v441
    %497 = vmatpush.bf16.msra.mxu0 %v440
    %498 = vmatmul.bf16.gmra.mxu0 %v485
    %v499 = vpop.f32.mrf.mxu0
    %v500 = vadd.f32 %v457, %v499
    %v501 = vpop.f32.mrf.mxu0
    %v502 = vadd.f32 %v462, %v501
    %503 = vmatmul.bf16.gmra.mxu0 %v488
    %v504 = vpop.f32.mrf.mxu0
    %v505 = vadd.f32 %v467, %v504
    %v506 = vpop.f32.mrf.mxu0
    %v507 = vadd.f32 %v472, %v506
    %508 = vdwg.mxu0
    %v509 = vmax.f32 %v500, 0.0
    %v510 = vmax.f32 %v502, 0.0
    %v511 = vmax.f32 %v505, 0.0
    %v512 = vmax.f32 %v507, 0.0
    %v513 = vpack.c.bf16 %v409, %v409
    %v514 = vpack.c.bf16 %v410, %v410
    %v515 = vpack.c.bf16 %v411, %v411
    %v516 = vpack.c.bf16 %v412, %v412
    %v517 = vunpack.c.l.bf16 %v513
    %v518 = vunpack.c.l.bf16 %v514
    %v519 = vunpack.c.l.bf16 %v515
    %v520 = vunpack.c.l.bf16 %v516
    %521 = vrot.lane.b32.xlu0 %v509, 2
    %v522 = vpop.permute.xlu0 %521
    %523 = vrot.lane.b32.xlu0 %v510, 2
    %v524 = vpop.permute.xlu0 %523
    %525 = vrot.lane.b32.xlu0 %v511, 2
    %v526 = vpop.permute.xlu0 %525
    %527 = vrot.lane.b32.xlu0 %v512, 2
    %v528 = vpop.permute.xlu0 %527
    %v529 = vsel %vm119, %v522, 0.0
    %v530 = vsel %vm119, %v524, 0.0
    %v531 = vsel %vm119, %v526, 0.0
    %v532 = vsel %vm119, %v528, 0.0
    %533 = vrot.lane.b32.xlu0 %v509, 4
    %v534 = vpop.permute.xlu0 %533
    %535 = vrot.lane.b32.xlu0 %v510, 4
    %v536 = vpop.permute.xlu0 %535
    %537 = vrot.lane.b32.xlu0 %v511, 4
    %v538 = vpop.permute.xlu0 %537
    %539 = vrot.lane.b32.xlu0 %v512, 4
    %v540 = vpop.permute.xlu0 %539
    %v541 = vsel %vm435, %v534, 0.0
    %v542 = vsel %vm435, %v536, 0.0
    %v543 = vsel %vm435, %v538, 0.0
    %v544 = vsel %vm435, %v540, 0.0
    %v545 = vpack.c.bf16 %v510, %v509
    %v546 = vpack.c.bf16 %v512, %v511
    %v547 = vpack.c.bf16 %v530, %v529
    %v548 = vpack.c.bf16 %v532, %v531
    %v549 = vpack.c.bf16 %v542, %v541
    %v550 = vpack.c.bf16 %v544, %v543
    %v551 = vld [vmem:[%s7] sm:$0xf]
    %v552 = vld [vmem:[%s7 + $0x4] sm:$0xf]
    %v553 = vld [vmem:[%s7 + $0x8] sm:$0xf]
    %v554 = vld [vmem:[%s7 + $0xc] sm:$0xf]
    %v555 = vld [vmem:[%s8] sm:$0xff]
    %v556 = vld [vmem:[%s8 + $0x8] sm:$0xff]
    %v557 = vld [vmem:[%s8 + $0x10] sm:$0xff]
    %v558 = vld [vmem:[%s8 + $0x18] sm:$0xff]
    %560 = vset.pattern.permute.xlu0 0
    %561 = vperm.xlu0 %560, %v555
    %v562 = vpop.permute.xlu0 %561
    %565 = vset.pattern.permute.xlu0 0
    %566 = vperm.xlu0 %565, %v556
    %v567 = vpop.permute.xlu0 %566
    %570 = vset.pattern.permute.xlu0 0
    %571 = vperm.xlu0 %570, %v557
    %v572 = vpop.permute.xlu0 %571
    %575 = vset.pattern.permute.xlu0 0
    %576 = vperm.xlu0 %575, %v558
    %v577 = vpop.permute.xlu0 %576
    %v583 = vunpack.c.l.b16 %v551
    %v584 = vunpack.c.l.b16 %v552
    %v585 = vunpack.c.l.b16 %v553
    %v586 = vunpack.c.l.b16 %v554
    %v587 = vpack.c.b16 %v584, %v583
    %v588 = vpack.c.b16 %v586, %v585
    %v590 = vsel %vm375, %v587, 0
    %v593 = vsel %vm375, %v588, 0
    %595 = vmatpush.bf16.msra.mxu0 0
    %596 = vmatpush.bf16.msra.mxu0 0
    %597 = vmatpush.bf16.msra.mxu0 %v550
    %598 = vmatpush.bf16.msra.mxu0 %v549
    %599 = vmatpush.bf16.msra.mxu0 %v548
    %600 = vmatpush.bf16.msra.mxu0 %v547
    %601 = vmatpush.bf16.msra.mxu0 %v546
    %602 = vmatpush.bf16.msra.mxu0 %v545
    %603 = vmatmul.bf16.gmra.mxu0 %v590
    %v604 = vpop.f32.mrf.mxu0
    %v605 = vadd.f32 %v562, %v604
    %v606 = vpop.f32.mrf.mxu0
    %v607 = vadd.f32 %v567, %v606
    %608 = vmatmul.bf16.gmra.mxu0 %v593
    %v609 = vpop.f32.mrf.mxu0
    %v610 = vadd.f32 %v572, %v609
    %v611 = vpop.f32.mrf.mxu0
    %v612 = vadd.f32 %v577, %v611
    %613 = vdwg.mxu0
    %v614 = vmax.f32 %v605, 0.0
    %v615 = vmax.f32 %v607, 0.0
    %v616 = vmax.f32 %v610, 0.0
    %v617 = vmax.f32 %v612, 0.0
    %v618 = vadd.f32 %v614, %v517
    %v619 = vadd.f32 %v615, %v518
    %v620 = vadd.f32 %v616, %v519
    %v621 = vadd.f32 %v617, %v520
    %v622 = vmax.f32 %v618, 0.0
    %v623 = vmax.f32 %v619, 0.0
    %v624 = vmax.f32 %v620, 0.0
    %v625 = vmax.f32 %v621, 0.0
    %vm626 = vcmp.ge.s32.totalorder %v65, 8
    %627 = vrot.lane.b32.xlu0 %v622, 4
    %v628 = vpop.permute.xlu0 %627
    %629 = vrot.lane.b32.xlu0 %v623, 4
    %v630 = vpop.permute.xlu0 %629
    %631 = vrot.lane.b32.xlu0 %v624, 4
    %v632 = vpop.permute.xlu0 %631
    %633 = vrot.lane.b32.xlu0 %v625, 4
    %v634 = vpop.permute.xlu0 %633
    %v635 = vsel %vm435, %v628, 0.0
    %v636 = vsel %vm435, %v630, 0.0
    %v637 = vsel %vm435, %v632, 0.0
    %v638 = vsel %vm435, %v634, 0.0
    %639 = vrot.lane.b32.xlu0 %v622, 8
    %v640 = vpop.permute.xlu0 %639
    %641 = vrot.lane.b32.xlu0 %v623, 8
    %v642 = vpop.permute.xlu0 %641
    %643 = vrot.lane.b32.xlu0 %v624, 8
    %v644 = vpop.permute.xlu0 %643
    %645 = vrot.lane.b32.xlu0 %v625, 8
    %v646 = vpop.permute.xlu0 %645
    %v647 = vsel %vm626, 1, 0
    %vm648 = vcmp.eq.s32.totalorder %v647, 1
    %v649 = vsel %vm648, %v640, 0.0
    %v650 = vsel %vm648, %v642, 0.0
    %v651 = vsel %vm648, %v644, 0.0
    %v652 = vsel %vm648, %v646, 0.0
    %v653 = vpack.c.bf16 %v623, %v622
    %v654 = vpack.c.bf16 %v625, %v624
    %v655 = vpack.c.bf16 %v636, %v635
    %v656 = vpack.c.bf16 %v638, %v637
    %v657 = vpack.c.bf16 %v650, %v649
    %v658 = vpack.c.bf16 %v652, %v651
    %v659 = vld [vmem:[%s9] sm:$0xf]
    %v660 = vld [vmem:[%s9 + $0x4] sm:$0xf]
    %v661 = vld [vmem:[%s9 + $0x8] sm:$0xf]
    %v662 = vld [vmem:[%s9 + $0xc] sm:$0xf]
    %v663 = vld [vmem:[%s10] sm:$0xff]
    %v664 = vld [vmem:[%s10 + $0x8] sm:$0xff]
    %v665 = vld [vmem:[%s10 + $0x10] sm:$0xff]
    %v666 = vld [vmem:[%s10 + $0x18] sm:$0xff]
    %668 = vset.pattern.permute.xlu0 0
    %669 = vperm.xlu0 %668, %v663
    %v670 = vpop.permute.xlu0 %669
    %673 = vset.pattern.permute.xlu0 0
    %674 = vperm.xlu0 %673, %v664
    %v675 = vpop.permute.xlu0 %674
    %678 = vset.pattern.permute.xlu0 0
    %679 = vperm.xlu0 %678, %v665
    %v680 = vpop.permute.xlu0 %679
    %683 = vset.pattern.permute.xlu0 0
    %684 = vperm.xlu0 %683, %v666
    %v685 = vpop.permute.xlu0 %684
    %v691 = vunpack.c.l.b16 %v659
    %v692 = vunpack.c.l.b16 %v660
    %v693 = vunpack.c.l.b16 %v661
    %v694 = vunpack.c.l.b16 %v662
    %v695 = vpack.c.b16 %v692, %v691
    %v696 = vpack.c.b16 %v694, %v693
    %v698 = vsel %vm375, %v695, 0
    %v701 = vsel %vm375, %v696, 0
    %703 = vmatpush.bf16.msra.mxu0 0
    %704 = vmatpush.bf16.msra.mxu0 0
    %705 = vmatpush.bf16.msra.mxu0 %v658
    %706 = vmatpush.bf16.msra.mxu0 %v657
    %707 = vmatpush.bf16.msra.mxu0 %v656
    %708 = vmatpush.bf16.msra.mxu0 %v655
    %709 = vmatpush.bf16.msra.mxu0 %v654
    %710 = vmatpush.bf16.msra.mxu0 %v653
    %711 = vmatmul.bf16.gmra.mxu0 %v698
    %v712 = vpop.f32.mrf.mxu0
    %v713 = vadd.f32 %v670, %v712
    %v714 = vpop.f32.mrf.mxu0
    %v715 = vadd.f32 %v675, %v714
    %716 = vmatmul.bf16.gmra.mxu0 %v701
    %v717 = vpop.f32.mrf.mxu0
    %v718 = vadd.f32 %v680, %v717
    %v719 = vpop.f32.mrf.mxu0
    %v720 = vadd.f32 %v685, %v719
    %721 = vdwg.mxu0
    %v722 = vmax.f32 %v713, 0.0
    %v723 = vmax.f32 %v715, 0.0
    %v724 = vmax.f32 %v718, 0.0
    %v725 = vmax.f32 %v720, 0.0
    %v726 = vpack.c.bf16 %v622, %v622
    %v727 = vpack.c.bf16 %v623, %v623
    %v728 = vpack.c.bf16 %v624, %v624
    %v729 = vpack.c.bf16 %v625, %v625
    %v730 = vunpack.c.l.bf16 %v726
    %v731 = vunpack.c.l.bf16 %v727
    %v732 = vunpack.c.l.bf16 %v728
    %v733 = vunpack.c.l.bf16 %v729
    %734 = vrot.lane.b32.xlu0 %v722, 4
    %v735 = vpop.permute.xlu0 %734
    %736 = vrot.lane.b32.xlu0 %v723, 4
    %v737 = vpop.permute.xlu0 %736
    %738 = vrot.lane.b32.xlu0 %v724, 4
    %v739 = vpop.permute.xlu0 %738
    %740 = vrot.lane.b32.xlu0 %v725, 4
    %v741 = vpop.permute.xlu0 %740
    %v742 = vsel %vm435, %v735, 0.0
    %v743 = vsel %vm435, %v737, 0.0
    %v744 = vsel %vm435, %v739, 0.0
    %v745 = vsel %vm435, %v741, 0.0
    %746 = vrot.lane.b32.xlu0 %v722, 8
    %v747 = vpop.permute.xlu0 %746
    %748 = vrot.lane.b32.xlu0 %v723, 8
    %v749 = vpop.permute.xlu0 %748
    %750 = vrot.lane.b32.xlu0 %v724, 8
    %v751 = vpop.permute.xlu0 %750
    %752 = vrot.lane.b32.xlu0 %v725, 8
    %v753 = vpop.permute.xlu0 %752
    %v754 = vsel %vm648, %v747, 0.0
    %v755 = vsel %vm648, %v749, 0.0
    %v756 = vsel %vm648, %v751, 0.0
    %v757 = vsel %vm648, %v753, 0.0
    %v758 = vpack.c.bf16 %v723, %v722
    %v759 = vpack.c.bf16 %v725, %v724
    %v760 = vpack.c.bf16 %v743, %v742
    %v761 = vpack.c.bf16 %v745, %v744
    %v762 = vpack.c.bf16 %v755, %v754
    %v763 = vpack.c.bf16 %v757, %v756
    %v764 = vld [vmem:[%s11] sm:$0xf]
    %v765 = vld [vmem:[%s11 + $0x4] sm:$0xf]
    %v766 = vld [vmem:[%s11 + $0x8] sm:$0xf]
    %v767 = vld [vmem:[%s11 + $0xc] sm:$0xf]
    %v768 = vld [vmem:[%s12] sm:$0xff]
    %v769 = vld [vmem:[%s12 + $0x8] sm:$0xff]
    %v770 = vld [vmem:[%s12 + $0x10] sm:$0xff]
    %v771 = vld [vmem:[%s12 + $0x18] sm:$0xff]
    %773 = vset.pattern.permute.xlu0 0
    %774 = vperm.xlu0 %773, %v768
    %v775 = vpop.permute.xlu0 %774
    %778 = vset.pattern.permute.xlu0 0
    %779 = vperm.xlu0 %778, %v769
    %v780 = vpop.permute.xlu0 %779
    %783 = vset.pattern.permute.xlu0 0
    %784 = vperm.xlu0 %783, %v770
    %v785 = vpop.permute.xlu0 %784
    %788 = vset.pattern.permute.xlu0 0
    %789 = vperm.xlu0 %788, %v771
    %v790 = vpop.permute.xlu0 %789
    %v796 = vunpack.c.l.b16 %v764
    %v797 = vunpack.c.l.b16 %v765
    %v798 = vunpack.c.l.b16 %v766
    %v799 = vunpack.c.l.b16 %v767
    %v800 = vpack.c.b16 %v797, %v796
    %v801 = vpack.c.b16 %v799, %v798
    %v803 = vsel %vm375, %v800, 0
    %v806 = vsel %vm375, %v801, 0
    %808 = vmatpush.bf16.msra.mxu0 0
    %809 = vmatpush.bf16.msra.mxu0 0
    %810 = vmatpush.bf16.msra.mxu0 %v763
    %811 = vmatpush.bf16.msra.mxu0 %v762
    %812 = vmatpush.bf16.msra.mxu0 %v761
    %813 = vmatpush.bf16.msra.mxu0 %v760
    %814 = vmatpush.bf16.msra.mxu0 %v759
    %815 = vmatpush.bf16.msra.mxu0 %v758
    %816 = vmatmul.bf16.gmra.mxu0 %v803
    %v817 = vpop.f32.mrf.mxu0
    %v818 = vadd.f32 %v775, %v817
    %v819 = vpop.f32.mrf.mxu0
    %v820 = vadd.f32 %v780, %v819
    %821 = vmatmul.bf16.gmra.mxu0 %v806
    %v822 = vpop.f32.mrf.mxu0
    %v823 = vadd.f32 %v785, %v822
    %v824 = vpop.f32.mrf.mxu0
    %v825 = vadd.f32 %v790, %v824
    %826 = vdwg.mxu0
    %v827 = vmax.f32 %v818, 0.0
    %v828 = vmax.f32 %v820, 0.0
    %v829 = vmax.f32 %v823, 0.0
    %v830 = vmax.f32 %v825, 0.0
    %v831 = vadd.f32 %v827, %v730
    %v832 = vadd.f32 %v828, %v731
    %v833 = vadd.f32 %v829, %v732
    %v834 = vadd.f32 %v830, %v733
    %v835 = vmax.f32 %v831, 0.0
    %v836 = vmax.f32 %v832, 0.0
    %v837 = vmax.f32 %v833, 0.0
    %v838 = vmax.f32 %v834, 0.0
    %v839 = vld [vmem:[%s13] sm:$0xff]
    %v840 = vld [vmem:[%s14] sm:$0xff]
    %842 = vset.pattern.permute.xlu0 0
    %843 = vperm.xlu0 %842, %v840
    %v844 = vpop.permute.xlu0 %843
    %vm846 = vcmask 261120
    %v848 = vsel %vm846, %v839, 0
    %850 = vmatpush.msra.mxu0 0.0
    %851 = vmatpush.msra.mxu0 0.0
    %852 = vmatpush.msra.mxu0 0.0
    %853 = vmatpush.msra.mxu0 0.0
    %854 = vmatpush.msra.mxu0 0.0
    %855 = vmatpush.msra.mxu0 0.0
    %856 = vmatpush.msra.mxu0 0.0
    %857 = vmatpush.msra.mxu0 0.0
    %858 = vmatpush.msra.mxu0 0.0
    %859 = vmatpush.msra.mxu0 0.0
    %860 = vmatpush.msra.mxu0 0.0
    %861 = vmatpush.msra.mxu0 0.0
    %862 = vmatpush.msra.mxu0 %v838
    %863 = vmatpush.msra.mxu0 %v837
    %864 = vmatpush.msra.mxu0 %v836
    %865 = vmatpush.msra.mxu0 %v835
    %866 = vmatmul.f32.gmra.mxu0 %v848
    %v867 = vpop.f32.mrf.mxu0
    %v868 = vadd.f32 %v844, %v867
    %869 = vdwg.mxu0
    %870 = vst [vmem:[#allocation2] sm:$0xff] %v868
    // Predicated region
    $region62: #{tpu_custom_call.1} parent=1 // pred_check
      _
    $region63: #{tpu_custom_call.1} parent=1 // pred_check_branch
      %872 = sbr.rel (0) target = $region65
    $region64: #{tpu_custom_call.1} parent=1 // pred_region
      %874 = vsyncadd [#allocation3], 0
      %s876 = sshll.u32 [#allocation2], 4
      %s877 = int_to_ptr.vmem [resolvable:$true] %s876
      %s878 = sshll.u32 %s15, 4
      %s879 = int_to_ptr.hbm [resolvable:$true] %s878
      %881 = dma.vmem_to_hbm [thread:$0]  %s877, 128, %s879, [#allocation3]
    $region65: #{tpu_custom_call.1} parent=1 // pred_fallthru
      _
    // Predicated region
    $region66: #{tpu_custom_call.1} parent=1 // pred_check
      _
    $region67: #{tpu_custom_call.1} parent=1 // pred_check_branch
      %883 = sbr.rel (0) target = $region69
    $region68: #{tpu_custom_call.1} parent=1 // pred_region
      %885 = dma.done [#allocation3], 128
    $region69: #{tpu_custom_call.1} parent=1 // pred_fallthru
      _
    %886 = vsyncpa [#allocation3], 1

</llo_original>
